<compile_context>
chip_gen: v7x
topology: tpu7x:2x2x1
jax: 0.10.0
libtpu: 0.0.40
codegen_flags: <defaults>
</compile_context>

<pallas_src>
import functools

import jax
import jax.numpy as jnp
from jax.experimental import pallas as pl
from jax.experimental.pallas import tpu as pltpu


# --------------------------------- kernel -----------------------------------

def _fused_ensemble_prior_kernel(x_ref,
                                 w1_ref, b1_ref,
                                 w2m_ref, w2p_ref, b2m_ref, b2p_ref,
                                 w3m_ref, w3p_ref, b3m_ref, b3p_ref,
                                 out_ref, *, e_hd, prior_scale, scale_folded):
    """Fused forward for one batch tile: main MLP + prior MLP, all E members.

    x    : (TB, In)          f32 (cast to bf16 in-kernel for the MXU)
    w1   : (In, 2*E*Hd)      bf16   b1 : (1, 2*E*Hd)   f32
    w2m/p: (E*Hd, E*Hd)      bf16   b2m/p : (1, E*Hd)  f32   (block-diag halves)
    w3m/p: (E*Hd, E*Out)     bf16   b3m/p : (1, E*Out) f32   (block-diag halves)
    out  : (TB, E*Out)       f32 = main + prior_scale * prior
    Column order everywhere is member-major: [e0 | e1 | ... | e{E-1}].
    """
    x = x_ref[...].astype(jnp.bfloat16)

    # Layer 1: one lane-dense 2*E*Hd-wide matmul covering main + prior.
    h1 = jnp.dot(x, w1_ref[...], preferred_element_type=jnp.float32) + b1_ref[...]
    h1 = jnp.maximum(h1, 0.0)
    h1m = h1[:, :e_hd].astype(jnp.bfloat16)    # main half   (TB, E*Hd)
    h1p = h1[:, e_hd:].astype(jnp.bfloat16)    # prior half  (TB, E*Hd)

    # Layer 2: two zero-free block-diagonal halves (main / prior).
    h2m = jnp.maximum(
        jnp.dot(h1m, w2m_ref[...], preferred_element_type=jnp.float32)
        + b2m_ref[...], 0.0).astype(jnp.bfloat16)
    h2p = jnp.maximum(
        jnp.dot(h1p, w2p_ref[...], preferred_element_type=jnp.float32)
        + b2p_ref[...], 0.0).astype(jnp.bfloat16)

    # Layer 3 + final ReLU (final_activation=nn.ReLU in the module).
    ym = jnp.maximum(
        jnp.dot(h2m, w3m_ref[...], preferred_element_type=jnp.float32)
        + b3m_ref[...], 0.0)
    yp = jnp.maximum(
        jnp.dot(h2p, w3p_ref[...], preferred_element_type=jnp.float32)
        + b3p_ref[...], 0.0)

    # prior output is .detach()'d in PyTorch -> forward value identical.
    if scale_folded:
        # prior_scale (>= 0) already folded into w3p/b3p at pack time.
        out_ref[...] = ym + yp
    else:
        out_ref[...] = ym + jnp.float32(prior_scale) * yp


# ----------------------------- weight packing --------------------------------
# Done ONCE outside the per-call hot path.

def pack_ensemble_prior_params(params, prior_params, prior_scale):
    E, In, Hd = params['w1'].shape
    Out = params['w3'].shape[-1]

    scale_folded = float(prior_scale) >= 0.0
    fold = jnp.float32(prior_scale) if scale_folded else jnp.float32(1.0)

    def cat_cols(w_m, w_p):
        # (E, fin, fout) x2 -> (fin, 2*E*fout); cols = [m_e0..m_e{E-1} | p_e0..p_e{E-1}]
        w = jnp.concatenate([w_m, w_p], axis=0)               # (2E, fin, fout)
        return jnp.transpose(w, (1, 0, 2)).reshape(w.shape[1], -1)

    def cat_bias(b_m, b_p):
        b = jnp.concatenate([b_m, b_p], axis=0)               # (2E, 1, fout)
        return jnp.transpose(b, (1, 0, 2)).reshape(1, -1)

    def block_diag(w):
        # (E, fin, fout) -> (E*fin, E*fout) block-diagonal (member-major).
        E_, fin, fout = w.shape
        eye = jnp.eye(E_, dtype=w.dtype)
        return jnp.einsum('ij,iab->iajb', eye, w).reshape(E_ * fin, E_ * fout)

    def bias_row(b):
        # (E, 1, fout) -> (1, E*fout) member-major.
        return jnp.transpose(b, (1, 0, 2)).reshape(1, -1)

    packed = {
        # Layer 1: fused main+prior, lane-dense 2*E*Hd columns.
        'w1': cat_cols(params['w1'], prior_params['w1']).astype(jnp.bfloat16),
        'b1': cat_bias(params['b1'], prior_params['b1']).astype(jnp.float32),
        # Layers 2/3: only the two non-zero (main / prior) block-diag halves.
        'w2m': block_diag(params['w2']).astype(jnp.bfloat16),
        'w2p': block_diag(prior_params['w2']).astype(jnp.bfloat16),
        'b2m': bias_row(params['b2']).astype(jnp.float32),
        'b2p': bias_row(prior_params['b2']).astype(jnp.float32),
        'w3m': block_diag(params['w3']).astype(jnp.bfloat16),
        'w3p': (fold * block_diag(prior_params['w3'])).astype(jnp.bfloat16),
        'b3m': bias_row(params['b3']).astype(jnp.float32),
        'b3p': (fold * bias_row(prior_params['b3'])).astype(jnp.float32),
    }
    meta = {'E': E, 'In': In, 'Hd': Hd, 'Out': Out,
            'prior_scale': float(prior_scale), 'scale_folded': scale_folded}
    return packed, meta


# -------------------------------- forward ------------------------------------

def ensemble_with_prior_forward(x, packed, meta, *, batch_tile=128):
    """x: (B, H, W) -> (B, E, Out)."""
    E, In, Out = meta['E'], meta['In'], meta['Out']
    e_hd = meta['E'] * meta['Hd']
    B = x.shape[0]
    x2 = x.reshape(B, In).astype(jnp.float32)        # nn.Flatten(start_dim=-2)

    # Batch tiling: pad to an 8-row (f32 sublane) multiple and run a grid over
    # batch tiles so large batches amortize the fixed per-call cost while the
    # weights stay pinned in VMEM (their index_map is constant -> DMA'd once).
    tb = int(min(batch_tile, max(8, pl.next_power_of_2(B))))
    tb = max(8, (tb // 8) * 8)
    bp = int(pl.cdiv(B, tb)) * tb
    if bp != B:
        x2 = jnp.pad(x2, ((0, bp - B), (0, 0)))

    kernel = functools.partial(
        _fused_ensemble_prior_kernel,
        e_hd=e_hd,
        prior_scale=meta['prior_scale'],
        scale_folded=meta['scale_folded'],
    )
    # TODO(synk): if prior_scale must vary at runtime without repacking,
    # pass it as a (1, 1) SMEM scalar instead of baking it statically.

    def pinned(arr):
        # Full-array block, constant index -> fetched once into VMEM and
        # reused for every grid step (blocked specs live in VMEM by default).
        return pl.BlockSpec(arr.shape, lambda i: (0, 0))

    out = pl.pallas_call(
        kernel,
        out_shape=jax.ShapeDtypeStruct((bp, E * Out), jnp.float32),
        grid=(bp // tb,),
        in_specs=[
            pl.BlockSpec((tb, In), lambda i: (i, 0)),
            pinned(packed['w1']), pinned(packed['b1']),
            pinned(packed['w2m']), pinned(packed['w2p']),
            pinned(packed['b2m']), pinned(packed['b2p']),
            pinned(packed['w3m']), pinned(packed['w3p']),
            pinned(packed['b3m']), pinned(packed['b3p']),
        ],
        out_specs=pl.BlockSpec((tb, E * Out), lambda i: (i, 0)),
        compiler_params=pltpu.CompilerParams(
            dimension_semantics=("parallel",)),   # v7x: shard batch tiles over both TCs
    )(x2,
      packed['w1'], packed['b1'],
      packed['w2m'], packed['w2p'], packed['b2m'], packed['b2p'],
      packed['w3m'], packed['w3p'], packed['b3m'], packed['b3p'])

    # Column order is already member-major [e0..e{E-1}] -> no swapaxes needed.
    return out[:B].reshape(B, E, Out)


# ----------------------- deterministic parameter init ------------------------

def _init_ensemble_linear(key, E, fan_in, fan_out, xavier_gain=None):
    wkey, bkey = jax.random.split(key)
    if xavier_gain is None:
        # main network: default-style uniform init (synthetic, deterministic)
        bound = 1.0 / (fan_in ** 0.5)
        w = jax.random.uniform(wkey, (E, fan_in, fan_out), jnp.float32,
                               -bound, bound)
        b = jax.random.uniform(bkey, (E, 1, fan_out), jnp.float32,
                               -bound, bound)
    else:
        # prior network: xavier_normal_(gain=calculate_gain('relu')), zero bias
        std = xavier_gain * (2.0 / (fan_in + fan_out)) ** 0.5
        w = std * jax.random.normal(wkey, (E, fan_in, fan_out), jnp.float32)
        b = jnp.zeros((E, 1, fan_out), jnp.float32)
    return w, b


def _make_net_params(key, E, In, Hd, Out, xavier_gain=None):
    k1, k2, k3 = jax.random.split(key, 3)
    p = {}
    p['w1'], p['b1'] = _init_ensemble_linear(k1, E, In, Hd, xavier_gain)
    p['w2'], p['b2'] = _init_ensemble_linear(k2, E, Hd, Hd, xavier_gain)
    p['w3'], p['b3'] = _init_ensemble_linear(k3, E, Hd, Out, xavier_gain)
    return p


# ------------------------------ pure-JAX reference ----------------------------

def _reference_forward(x, params, prior_params, prior_scale):
    B = x.shape[0]
    xf = x.reshape(B, -1)

    def mlp(p):
        h = jnp.maximum(jnp.einsum('bi,eio->ebo', xf, p['w1']) + p['b1'], 0.0)
        h = jnp.maximum(jnp.einsum('ebi,eio->ebo', h, p['w2']) + p['b2'], 0.0)
        return jnp.maximum(
            jnp.einsum('ebi,eio->ebo', h, p['w3']) + p['b3'], 0.0)

    out = mlp(params) + prior_scale * mlp(prior_params)
    return jnp.swapaxes(out, 0, 1)


if __name__ == "__main__":
    key = jax.random.PRNGKey(0)
    kx, kx2, kmain, kprior = jax.random.split(key, 4)

    # small DeepSea-like shapes
    B, H, W = 2, 8, 8            # x: (batch, rows, cols); input_size = H*W = 64
    Hd = 32                       # hidden_size
    Out = 4                       # output_size (num actions)
    E = 4                         # ensemble_size

    main_params = _make_net_params(kmain, E, H * W, Hd, Out, xavier_gain=None)
    relu_gain = 2.0 ** 0.5        # torch.nn.init.calculate_gain('relu')
    prior_params = _make_net_params(kprior, E, H * W, Hd, Out,
                                    xavier_gain=relu_gain)

    # --- Test 1: module-sized batch, positive prior_scale (scale folded) ----
    prior_scale = 3.0
    x = jax.random.normal(kx, (B, H, W), jnp.float32)
    packed, meta = pack_ensemble_prior_params(main_params, prior_params,
                                              prior_scale)
    out = jax.block_until_ready(ensemble_with_prior_forward(x, packed, meta))
    assert out.shape == (B, E, Out), out.shape
    ref = _reference_forward(x, main_params, prior_params, prior_scale)
    # bf16 weights vs f32 reference -> loosened tolerance.
    assert jnp.allclose(out, ref, atol=1e-1, rtol=5e-2), \
        float(jnp.max(jnp.abs(out - ref)))

    # --- Test 2: large batch (multi-tile grid, pinned weights), negative scale
    prior_scale_neg = -1.5
    x_big = jax.random.normal(kx2, (260, H, W), jnp.float32)
    packed_n, meta_n = pack_ensemble_prior_params(main_params, prior_params,
                                                  prior_scale_neg)
    out_big = jax.block_until_ready(
        ensemble_with_prior_forward(x_big, packed_n, meta_n))
    assert out_big.shape == (260, E, Out), out_big.shape
    ref_big = _reference_forward(x_big, main_params, prior_params,
                                 prior_scale_neg)
    assert jnp.allclose(out_big, ref_big, atol=1e-1, rtol=5e-2), \
        float(jnp.max(jnp.abs(out_big - ref_big)))

    print("KERNEL_OK")
</pallas_src>

<mosaic_0001>
module attributes {stable_mosaic.version = 11 : i64} {
  func.func @_fused_ensemble_prior_kernel(%arg0: i32, %arg1: memref<8x64xf32, #tpu.memory_space<vmem>>, %arg2: memref<64x256xbf16, #tpu.memory_space<vmem>>, %arg3: memref<1x256xf32, #tpu.memory_space<vmem>>, %arg4: memref<128x128xbf16, #tpu.memory_space<vmem>>, %arg5: memref<128x128xbf16, #tpu.memory_space<vmem>>, %arg6: memref<1x128xf32, #tpu.memory_space<vmem>>, %arg7: memref<1x128xf32, #tpu.memory_space<vmem>>, %arg8: memref<128x16xbf16, #tpu.memory_space<vmem>>, %arg9: memref<128x16xbf16, #tpu.memory_space<vmem>>, %arg10: memref<1x16xf32, #tpu.memory_space<vmem>>, %arg11: memref<1x16xf32, #tpu.memory_space<vmem>>, %arg12: memref<8x16xf32, #tpu.memory_space<vmem>>) attributes {dimension_semantics = [#tpu.dimension_semantics<parallel>], iteration_bounds = array<i64: 1>, scalar_prefetch = 0 : i64, scratch_operands = 0 : i64, tpu.core_type = #tpu.core_type<tc>, window_params = [{transform_indices = @transform_0, window_bounds = array<i64: 8, 64>}, {pipeline_mode = #tpu.pipeline_mode<synchronous>, transform_indices = @transform_1, window_bounds = array<i64: 64, 256>}, {pipeline_mode = #tpu.pipeline_mode<synchronous>, transform_indices = @transform_2, window_bounds = array<i64: 1, 256>}, {pipeline_mode = #tpu.pipeline_mode<synchronous>, transform_indices = @transform_3, window_bounds = array<i64: 128, 128>}, {pipeline_mode = #tpu.pipeline_mode<synchronous>, transform_indices = @transform_4, window_bounds = array<i64: 128, 128>}, {pipeline_mode = #tpu.pipeline_mode<synchronous>, transform_indices = @transform_5, window_bounds = array<i64: 1, 128>}, {pipeline_mode = #tpu.pipeline_mode<synchronous>, transform_indices = @transform_6, window_bounds = array<i64: 1, 128>}, {pipeline_mode = #tpu.pipeline_mode<synchronous>, transform_indices = @transform_7, window_bounds = array<i64: 128, 16>}, {pipeline_mode = #tpu.pipeline_mode<synchronous>, transform_indices = @transform_8, window_bounds = array<i64: 128, 16>}, {pipeline_mode = #tpu.pipeline_mode<synchronous>, transform_indices = @transform_9, window_bounds = array<i64: 1, 16>}, {pipeline_mode = #tpu.pipeline_mode<synchronous>, transform_indices = @transform_10, window_bounds = array<i64: 1, 16>}, {transform_indices = @transform_11, window_bounds = array<i64: 8, 16>}]} {
    %c0 = arith.constant 0 : index
    %c0_0 = arith.constant 0 : index
    %0 = vector.load %arg1[%c0, %c0_0] : memref<8x64xf32, #tpu.memory_space<vmem>>, vector<8x64xf32>
    %1 = arith.truncf %0 : vector<8x64xf32> to vector<8x64xbf16>
    %c0_1 = arith.constant 0 : index
    %c0_2 = arith.constant 0 : index
    %2 = vector.load %arg2[%c0_1, %c0_2] : memref<64x256xbf16, #tpu.memory_space<vmem>>, vector<64x256xbf16>
    %cst = arith.constant dense<0.000000e+00> : vector<8x256xf32>
    %3 = tpu.matmul %1, %2, %cst {dimension_numbers = #tpu.dot_dimension_numbers<[1], [0], [0], [1], [0, 0, 1, 1], [], []>} : vector<8x64xbf16>, vector<64x256xbf16>, vector<8x256xf32> -> vector<8x256xf32>
    %c0_3 = arith.constant 0 : index
    %c0_4 = arith.constant 0 : index
    %4 = vector.load %arg3[%c0_3, %c0_4] : memref<1x256xf32, #tpu.memory_space<vmem>>, vector<1x256xf32>
    %5 = vector.broadcast %4 : vector<1x256xf32> to vector<8x256xf32>
    %6 = arith.addf %3, %5 : vector<8x256xf32>
    %cst_5 = arith.constant 0.000000e+00 : f32
    %7 = vector.broadcast %cst_5 : f32 to vector<8x256xf32>
    %8 = arith.maximumf %6, %7 : vector<8x256xf32>
    %9 = vector.extract_strided_slice %8 {offsets = [0, 0], sizes = [8, 128], strides = [1, 1]} : vector<8x256xf32> to vector<8x128xf32>
    %10 = arith.truncf %9 : vector<8x128xf32> to vector<8x128xbf16>
    %11 = vector.extract_strided_slice %8 {offsets = [0, 128], sizes = [8, 128], strides = [1, 1]} : vector<8x256xf32> to vector<8x128xf32>
    %12 = arith.truncf %11 : vector<8x128xf32> to vector<8x128xbf16>
    %c0_6 = arith.constant 0 : index
    %c0_7 = arith.constant 0 : index
    %13 = vector.load %arg4[%c0_6, %c0_7] : memref<128x128xbf16, #tpu.memory_space<vmem>>, vector<128x128xbf16>
    %cst_8 = arith.constant dense<0.000000e+00> : vector<8x128xf32>
    %14 = tpu.matmul %10, %13, %cst_8 {dimension_numbers = #tpu.dot_dimension_numbers<[1], [0], [0], [1], [0, 0, 1, 1], [], []>} : vector<8x128xbf16>, vector<128x128xbf16>, vector<8x128xf32> -> vector<8x128xf32>
    %c0_9 = arith.constant 0 : index
    %c0_10 = arith.constant 0 : index
    %15 = vector.load %arg6[%c0_9, %c0_10] : memref<1x128xf32, #tpu.memory_space<vmem>>, vector<1x128xf32>
    %16 = vector.broadcast %15 : vector<1x128xf32> to vector<8x128xf32>
    %17 = arith.addf %14, %16 : vector<8x128xf32>
    %cst_11 = arith.constant 0.000000e+00 : f32
    %18 = vector.broadcast %cst_11 : f32 to vector<8x128xf32>
    %19 = arith.maximumf %17, %18 : vector<8x128xf32>
    %20 = arith.truncf %19 : vector<8x128xf32> to vector<8x128xbf16>
    %c0_12 = arith.constant 0 : index
    %c0_13 = arith.constant 0 : index
    %21 = vector.load %arg5[%c0_12, %c0_13] : memref<128x128xbf16, #tpu.memory_space<vmem>>, vector<128x128xbf16>
    %cst_14 = arith.constant dense<0.000000e+00> : vector<8x128xf32>
    %22 = tpu.matmul %12, %21, %cst_14 {dimension_numbers = #tpu.dot_dimension_numbers<[1], [0], [0], [1], [0, 0, 1, 1], [], []>} : vector<8x128xbf16>, vector<128x128xbf16>, vector<8x128xf32> -> vector<8x128xf32>
    %c0_15 = arith.constant 0 : index
    %c0_16 = arith.constant 0 : index
    %23 = vector.load %arg7[%c0_15, %c0_16] : memref<1x128xf32, #tpu.memory_space<vmem>>, vector<1x128xf32>
    %24 = vector.broadcast %23 : vector<1x128xf32> to vector<8x128xf32>
    %25 = arith.addf %22, %24 : vector<8x128xf32>
    %cst_17 = arith.constant 0.000000e+00 : f32
    %26 = vector.broadcast %cst_17 : f32 to vector<8x128xf32>
    %27 = arith.maximumf %25, %26 : vector<8x128xf32>
    %28 = arith.truncf %27 : vector<8x128xf32> to vector<8x128xbf16>
    %c0_18 = arith.constant 0 : index
    %c0_19 = arith.constant 0 : index
    %29 = vector.load %arg8[%c0_18, %c0_19] : memref<128x16xbf16, #tpu.memory_space<vmem>>, vector<128x16xbf16>
    %cst_20 = arith.constant dense<0.000000e+00> : vector<8x16xf32>
    %30 = tpu.matmul %20, %29, %cst_20 {dimension_numbers = #tpu.dot_dimension_numbers<[1], [0], [0], [1], [0, 0, 1, 1], [], []>} : vector<8x128xbf16>, vector<128x16xbf16>, vector<8x16xf32> -> vector<8x16xf32>
    %c0_21 = arith.constant 0 : index
    %c0_22 = arith.constant 0 : index
    %31 = vector.load %arg10[%c0_21, %c0_22] : memref<1x16xf32, #tpu.memory_space<vmem>>, vector<1x16xf32>
    %32 = vector.broadcast %31 : vector<1x16xf32> to vector<8x16xf32>
    %33 = arith.addf %30, %32 : vector<8x16xf32>
    %cst_23 = arith.constant 0.000000e+00 : f32
    %34 = vector.broadcast %cst_23 : f32 to vector<8x16xf32>
    %35 = arith.maximumf %33, %34 : vector<8x16xf32>
    %c0_24 = arith.constant 0 : index
    %c0_25 = arith.constant 0 : index
    %36 = vector.load %arg9[%c0_24, %c0_25] : memref<128x16xbf16, #tpu.memory_space<vmem>>, vector<128x16xbf16>
    %cst_26 = arith.constant dense<0.000000e+00> : vector<8x16xf32>
    %37 = tpu.matmul %28, %36, %cst_26 {dimension_numbers = #tpu.dot_dimension_numbers<[1], [0], [0], [1], [0, 0, 1, 1], [], []>} : vector<8x128xbf16>, vector<128x16xbf16>, vector<8x16xf32> -> vector<8x16xf32>
    %c0_27 = arith.constant 0 : index
    %c0_28 = arith.constant 0 : index
    %38 = vector.load %arg11[%c0_27, %c0_28] : memref<1x16xf32, #tpu.memory_space<vmem>>, vector<1x16xf32>
    %39 = vector.broadcast %38 : vector<1x16xf32> to vector<8x16xf32>
    %40 = arith.addf %37, %39 : vector<8x16xf32>
    %cst_29 = arith.constant 0.000000e+00 : f32
    %41 = vector.broadcast %cst_29 : f32 to vector<8x16xf32>
    %42 = arith.maximumf %40, %41 : vector<8x16xf32>
    %43 = arith.addf %35, %42 : vector<8x16xf32>
    %c0_30 = arith.constant 0 : index
    %c0_31 = arith.constant 0 : index
    %44 = vector.load %arg12[%c0_30, %c0_31] : memref<8x16xf32, #tpu.memory_space<vmem>>, vector<8x16xf32>
    tpu.vector_store %arg12[%c0_30, %c0_31], %43 {strides = array<i32>} : memref<8x16xf32, #tpu.memory_space<vmem>>, vector<8x16xf32>,
    return
  }
  func.func @transform_0(%arg0: i32) -> (i32, i32) {
    %c0_i32 = arith.constant 0 : i32
    %c0_i32_0 = arith.constant 0 : i32
    return %arg0, %c0_i32 : i32, i32
  }
  func.func @transform_1(%arg0: i32) -> (i32, i32) {
    %c0_i32 = arith.constant 0 : i32
    %c0_i32_0 = arith.constant 0 : i32
    %c0_i32_1 = arith.constant 0 : i32
    return %c0_i32, %c0_i32_0 : i32, i32
  }
  func.func @transform_2(%arg0: i32) -> (i32, i32) {
    %c0_i32 = arith.constant 0 : i32
    %c0_i32_0 = arith.constant 0 : i32
    %c0_i32_1 = arith.constant 0 : i32
    return %c0_i32, %c0_i32_0 : i32, i32
  }
  func.func @transform_3(%arg0: i32) -> (i32, i32) {
    %c0_i32 = arith.constant 0 : i32
    %c0_i32_0 = arith.constant 0 : i32
    %c0_i32_1 = arith.constant 0 : i32
    return %c0_i32, %c0_i32_0 : i32, i32
  }
  func.func @transform_4(%arg0: i32) -> (i32, i32) {
    %c0_i32 = arith.constant 0 : i32
    %c0_i32_0 = arith.constant 0 : i32
    %c0_i32_1 = arith.constant 0 : i32
    return %c0_i32, %c0_i32_0 : i32, i32
  }
  func.func @transform_5(%arg0: i32) -> (i32, i32) {
    %c0_i32 = arith.constant 0 : i32
    %c0_i32_0 = arith.constant 0 : i32
    %c0_i32_1 = arith.constant 0 : i32
    return %c0_i32, %c0_i32_0 : i32, i32
  }
  func.func @transform_6(%arg0: i32) -> (i32, i32) {
    %c0_i32 = arith.constant 0 : i32
    %c0_i32_0 = arith.constant 0 : i32
    %c0_i32_1 = arith.constant 0 : i32
    return %c0_i32, %c0_i32_0 : i32, i32
  }
  func.func @transform_7(%arg0: i32) -> (i32, i32) {
    %c0_i32 = arith.constant 0 : i32
    %c0_i32_0 = arith.constant 0 : i32
    %c0_i32_1 = arith.constant 0 : i32
    return %c0_i32, %c0_i32_0 : i32, i32
  }
  func.func @transform_8(%arg0: i32) -> (i32, i32) {
    %c0_i32 = arith.constant 0 : i32
    %c0_i32_0 = arith.constant 0 : i32
    %c0_i32_1 = arith.constant 0 : i32
    return %c0_i32, %c0_i32_0 : i32, i32
  }
  func.func @transform_9(%arg0: i32) -> (i32, i32) {
    %c0_i32 = arith.constant 0 : i32
    %c0_i32_0 = arith.constant 0 : i32
    %c0_i32_1 = arith.constant 0 : i32
    return %c0_i32, %c0_i32_0 : i32, i32
  }
  func.func @transform_10(%arg0: i32) -> (i32, i32) {
    %c0_i32 = arith.constant 0 : i32
    %c0_i32_0 = arith.constant 0 : i32
    %c0_i32_1 = arith.constant 0 : i32
    return %c0_i32, %c0_i32_0 : i32, i32
  }
  func.func @transform_11(%arg0: i32) -> (i32, i32) {
    %c0_i32 = arith.constant 0 : i32
    %c0_i32_0 = arith.constant 0 : i32
    return %arg0, %c0_i32 : i32, i32
  }
}

</mosaic_0001>

<llo_original>
// kernel: tpu_custom_call.1
$region0: #{tpu_custom_call.1}
  #allocation0 [shape = 'u32[]', space=smem, size = 0x4, offset = 0x4, fixed_abs, tag = 'smem constant byte address 0x4 - core index']
  #allocation1 [shape = 'u32[144,128]{1,0:T(1,128)}', space=vmem, size = 0x12000, scoped, tag = 'internal scratch']
  %s0 = inlined_call_operand.vmem [shape: f32[8,64], index: 0, kind: input, shape index: {}]
  %s1 = inlined_call_operand.vmem [shape: bf16[64,256], index: 1, kind: input, shape index: {}]
  %s2 = inlined_call_operand.vmem [shape: f32[1,256], index: 2, kind: input, shape index: {}]
  %s3 = inlined_call_operand.vmem [shape: bf16[128,128], index: 3, kind: input, shape index: {}]
  %s4 = inlined_call_operand.hbm [shape: bf16[128,128], index: 4, kind: input, shape index: {}]
  %s5 = inlined_call_operand.vmem [shape: f32[1,128], index: 5, kind: input, shape index: {}]
  %s6 = inlined_call_operand.vmem [shape: f32[1,128], index: 6, kind: input, shape index: {}]
  %s7 = inlined_call_operand.vmem [shape: bf16[128,16], index: 7, kind: input, shape index: {}]
  %s8 = inlined_call_operand.vmem [shape: bf16[128,16], index: 8, kind: input, shape index: {}]
  %s9 = inlined_call_operand.vmem [shape: f32[1,16], index: 9, kind: input, shape index: {}]
  %s10 = inlined_call_operand.vmem [shape: f32[1,16], index: 10, kind: input, shape index: {}]
  %s11 = inlined_call_operand.hbm [shape: f32[8,16], index: 11, kind: output, shape index: {}]
  %s12 = sld [smem:[#allocation0]]
  $region58: #{tpu_custom_call.1} parent=0
    _
  %s14 = ssub.s32 1, %s12
  %s15 = scalar_select 0, %s14, %s12
  $region1: #{tpu_custom_call.1} parent=0
    #allocation2 [shape = 'u8[32768]{0}', space=vmem, size = 0x8000, scoped, tag = 'input window, operand 4, single buffered']
    #allocation3 [shape = 's32[1]{0}', space=sflag, size = 0x4, scoped, tag = 'scoped memory for tpu_custom_call.1']
    #allocation4 [shape = 's32[1]{0}', space=sflag, size = 0x4, scoped, tag = 'scoped memory for tpu_custom_call.1']
    #allocation5 [shape = 'u8[4096]{0}', space=vmem, size = 0x1000, scoped, tag = 'output window, operand 0, single buffered']
    %16 = vsyncpa [#allocation3], 0
    %17 = vsyncpa [#allocation4], 0
    // Predicated region
    $region2: #{tpu_custom_call.1} parent=1 // pred_check
      _
    $region3: #{tpu_custom_call.1} parent=1 // pred_check_branch
      %19 = sbr.rel (0) target = $region5
    $region4: #{tpu_custom_call.1} parent=1 // pred_region
      _
    $region5: #{tpu_custom_call.1} parent=1 // pred_fallthru
      _
    // Predicated region
    $region6: #{tpu_custom_call.1} parent=1 // pred_check
      _
    $region7: #{tpu_custom_call.1} parent=1 // pred_check_branch
      %21 = sbr.rel (0) target = $region9
    $region8: #{tpu_custom_call.1} parent=1 // pred_region
      _
    $region9: #{tpu_custom_call.1} parent=1 // pred_fallthru
      _
    // Predicated region
    $region10: #{tpu_custom_call.1} parent=1 // pred_check
      _
    $region11: #{tpu_custom_call.1} parent=1 // pred_check_branch
      %23 = sbr.rel (0) target = $region13
    $region12: #{tpu_custom_call.1} parent=1 // pred_region
      _
    $region13: #{tpu_custom_call.1} parent=1 // pred_fallthru
      _
    // Predicated region
    $region14: #{tpu_custom_call.1} parent=1 // pred_check
      _
    $region15: #{tpu_custom_call.1} parent=1 // pred_check_branch
      %25 = sbr.rel (0) target = $region17
    $region16: #{tpu_custom_call.1} parent=1 // pred_region
      _
    $region17: #{tpu_custom_call.1} parent=1 // pred_fallthru
      _
    // Predicated region
    $region18: #{tpu_custom_call.1} parent=1 // pred_check
      _
    $region19: #{tpu_custom_call.1} parent=1 // pred_check_branch
      %27 = sbr.rel (0) target = $region21
    $region20: #{tpu_custom_call.1} parent=1 // pred_region
      %s29 = ssub.s32 1024, 1024
      %30 = vsyncadd [#allocation3], %s29
      %s31 = sshll.u32 [#allocation2], 4
      %s32 = int_to_ptr.vmem [resolvable:$true] %s31
      %37 = dma.hbm_to_vmem [thread:$0]  %s4, 1024, %s32, [#allocation3], 64, 64, 4
    $region21: #{tpu_custom_call.1} parent=1 // pred_fallthru
      _
    // Predicated region
    $region22: #{tpu_custom_call.1} parent=1 // pred_check
      _
    $region23: #{tpu_custom_call.1} parent=1 // pred_check_branch
      %39 = sbr.rel (0) target = $region25
    $region24: #{tpu_custom_call.1} parent=1 // pred_region
      _
    $region25: #{tpu_custom_call.1} parent=1 // pred_fallthru
      _
    // Predicated region
    $region26: #{tpu_custom_call.1} parent=1 // pred_check
      _
    $region27: #{tpu_custom_call.1} parent=1 // pred_check_branch
      %41 = sbr.rel (0) target = $region29
    $region28: #{tpu_custom_call.1} parent=1 // pred_region
      _
    $region29: #{tpu_custom_call.1} parent=1 // pred_fallthru
      _
    // Predicated region
    $region30: #{tpu_custom_call.1} parent=1 // pred_check
      _
    $region31: #{tpu_custom_call.1} parent=1 // pred_check_branch
      %43 = sbr.rel (0) target = $region33
    $region32: #{tpu_custom_call.1} parent=1 // pred_region
      _
    $region33: #{tpu_custom_call.1} parent=1 // pred_fallthru
      _
    // Predicated region
    $region34: #{tpu_custom_call.1} parent=1 // pred_check
      _
    $region35: #{tpu_custom_call.1} parent=1 // pred_check_branch
      %45 = sbr.rel (0) target = $region37
    $region36: #{tpu_custom_call.1} parent=1 // pred_region
      _
    $region37: #{tpu_custom_call.1} parent=1 // pred_fallthru
      _
    // Predicated region
    $region38: #{tpu_custom_call.1} parent=1 // pred_check
      _
    $region39: #{tpu_custom_call.1} parent=1 // pred_check_branch
      %47 = sbr.rel (0) target = $region41
    $region40: #{tpu_custom_call.1} parent=1 // pred_region
      _
    $region41: #{tpu_custom_call.1} parent=1 // pred_fallthru
      _
    // Predicated region
    $region42: #{tpu_custom_call.1} parent=1 // pred_check
      _
    $region43: #{tpu_custom_call.1} parent=1 // pred_check_branch
      %49 = sbr.rel (0) target = $region45
    $region44: #{tpu_custom_call.1} parent=1 // pred_region
      _
    $region45: #{tpu_custom_call.1} parent=1 // pred_fallthru
      _
    // Predicated region
    $region46: #{tpu_custom_call.1} parent=1 // pred_check
      _
    $region47: #{tpu_custom_call.1} parent=1 // pred_check_branch
      %51 = sbr.rel (0) target = $region49
    $region48: #{tpu_custom_call.1} parent=1 // pred_region
      %52 = dma.done [#allocation3], 1024
    $region49: #{tpu_custom_call.1} parent=1 // pred_fallthru
      _
    %v54 = vld [vmem:[%s0] sm:$0xff]
    %v55 = vpack.c.bf16 %v54, %v54
    %v56 = vld [vmem:[%s1] sm:$0xff]
    %v57 = vld [vmem:[%s1 + $0x8] sm:$0xff]
    %v58 = vld [vmem:[%s1 + $0x10] sm:$0xff]
    %v59 = vld [vmem:[%s1 + $0x18] sm:$0xff]
    %v60 = vld [vmem:[%s1 + $0x20] sm:$0xff]
    %v61 = vld [vmem:[%s1 + $0x28] sm:$0xff]
    %v62 = vld [vmem:[%s1 + $0x30] sm:$0xff]
    %v63 = vld [vmem:[%s1 + $0x38] sm:$0xff]
    %v64 = vld [vmem:[%s2] sm:$0x3]
    %v66 = vlaneseq
    %v67 = vshrl.u32 %v66, 7
    %v68 = vsub.s32 0, %v67
    %v69 = vrot.slane %v64, %v68
    %v70 = vlaneseq
    %v71 = vshrl.u32 %v70, 7
    %v72 = vsub.s32 1, %v71
    %v73 = vrot.slane %v64, %v72
    %v84 = vunpack.c.l.b16 %v56
    %v85 = vunpack.c.h.b16 %v56
    %v86 = vunpack.c.l.b16 %v57
    %v87 = vunpack.c.h.b16 %v57
    %v88 = vunpack.c.l.b16 %v58
    %v89 = vunpack.c.h.b16 %v58
    %v90 = vunpack.c.l.b16 %v59
    %v91 = vunpack.c.h.b16 %v59
    %v92 = vunpack.c.l.b16 %v60
    %v93 = vunpack.c.h.b16 %v60
    %v94 = vunpack.c.l.b16 %v61
    %v95 = vunpack.c.h.b16 %v61
    %v96 = vunpack.c.l.b16 %v62
    %v97 = vunpack.c.h.b16 %v62
    %v98 = vunpack.c.l.b16 %v63
    %v99 = vunpack.c.h.b16 %v63
    %v100 = vpack.c.b16 %v86, %v84
    %v101 = vpack.c.b16 %v87, %v85
    %v102 = vpack.c.b16 %v90, %v88
    %v103 = vpack.c.b16 %v91, %v89
    %v104 = vpack.c.b16 %v94, %v92
    %v105 = vpack.c.b16 %v95, %v93
    %v106 = vpack.c.b16 %v98, %v96
    %v107 = vpack.c.b16 %v99, %v97
    %vm116 = vcmask 523264
    %v118 = vsel %vm116, %v55, 0
    %120 = vmatprep.subr.bf16.mxu0 %v101
    %121 = vmatpush1.bf16.msra.mxu0 %v100
    %122 = vmatprep.subr.bf16.mxu0 %v103
    %123 = vmatpush1.bf16.msra.mxu0 %v102
    %124 = vmatprep.subr.bf16.mxu0 %v105
    %125 = vmatpush1.bf16.msra.mxu0 %v104
    %126 = vmatprep.subr.bf16.mxu0 %v107
    %127 = vmatpush1.bf16.msra.mxu0 %v106
    %128 = vmatprep.subr.bf16.mxu0 0
    %129 = vmatpush1.bf16.msra.mxu0 0
    %130 = vmatprep.subr.bf16.mxu0 0
    %131 = vmatpush1.bf16.msra.mxu0 0
    %132 = vmatprep.subr.bf16.mxu0 0
    %133 = vmatpush1.bf16.msra.mxu0 0
    %134 = vmatprep.subr.bf16.mxu0 0
    %135 = vmatpush1.bf16.msra.mxu0 0
    %136 = vmatprep.subr.bf16.mxu0 0
    %137 = vmatpush1.bf16.msra.mxu0 0
    %138 = vmatprep.subr.bf16.mxu0 0
    %139 = vmatpush1.bf16.msra.mxu0 0
    %140 = vmatprep.subr.bf16.mxu0 0
    %141 = vmatpush1.bf16.msra.mxu0 0
    %142 = vmatprep.subr.bf16.mxu0 0
    %143 = vmatpush1.bf16.msra.mxu0 0
    %144 = vmatprep.subr.bf16.mxu0 0
    %145 = vmatpush1.bf16.msra.mxu0 0
    %146 = vmatprep.subr.bf16.mxu0 0
    %147 = vmatpush1.bf16.msra.mxu0 0
    %148 = vmatprep.subr.bf16.mxu0 0
    %149 = vmatpush1.bf16.msra.mxu0 0
    %150 = vmatprep.subr.bf16.mxu0 0
    %151 = vmatpush1.bf16.msra.mxu0 0
    %152 = vmatprep.mubr.bf16.mxu0 0
    %153 = vmatmul.mubr.bf16.gmra.mrb[0].mxu0 %v118
    %v154 = vpop.f32.mrb[0].mxu0
    %v155 = vadd.f32 %v69, %v154
    %v156 = vpop.f32.mrb[0].mxu0
    %v157 = vadd.f32 %v73, %v156
    %v158 = vpop.f32.mrb[0].mxu0
    %v159 = vpop.f32.mrb[0].mxu0
    %160 = vdwg.mxu0
    %v161 = vmax.f32 %v155, 0.0
    %v162 = vmax.f32 %v157, 0.0
    %v163 = vpack.c.bf16 %v161, %v161
    %v164 = vpack.c.bf16 %v162, %v162
    %v165 = vld [vmem:[%s3] sm:$0xf]
    %v166 = vld [vmem:[%s3 + $0x4] sm:$0xf]
    %v167 = vld [vmem:[%s3 + $0x8] sm:$0xf]
    %v168 = vld [vmem:[%s3 + $0xc] sm:$0xf]
    %v169 = vld [vmem:[%s3 + $0x10] sm:$0xf]
    %v170 = vld [vmem:[%s3 + $0x14] sm:$0xf]
    %v171 = vld [vmem:[%s3 + $0x18] sm:$0xf]
    %v172 = vld [vmem:[%s3 + $0x1c] sm:$0xf]
    %v173 = vld [vmem:[%s3 + $0x20] sm:$0xf]
    %v174 = vld [vmem:[%s3 + $0x24] sm:$0xf]
    %v175 = vld [vmem:[%s3 + $0x28] sm:$0xf]
    %v176 = vld [vmem:[%s3 + $0x2c] sm:$0xf]
    %v177 = vld [vmem:[%s3 + $0x30] sm:$0xf]
    %v178 = vld [vmem:[%s3 + $0x34] sm:$0xf]
    %v179 = vld [vmem:[%s3 + $0x38] sm:$0xf]
    %v180 = vld [vmem:[%s3 + $0x3c] sm:$0xf]
    %v181 = vld [vmem:[%s5] sm:$0x1]
    %v183 = vlaneseq
    %v184 = vshrl.u32 %v183, 7
    %v185 = vsub.s32 0, %v184
    %v186 = vrot.slane %v181, %v185
    %v204 = vunpack.c.l.b16 %v165
    %v205 = vunpack.c.l.b16 %v166
    %v206 = vunpack.c.l.b16 %v167
    %v207 = vunpack.c.l.b16 %v168
    %v208 = vunpack.c.l.b16 %v169
    %v209 = vunpack.c.l.b16 %v170
    %v210 = vunpack.c.l.b16 %v171
    %v211 = vunpack.c.l.b16 %v172
    %v212 = vunpack.c.l.b16 %v173
    %v213 = vunpack.c.l.b16 %v174
    %v214 = vunpack.c.l.b16 %v175
    %v215 = vunpack.c.l.b16 %v176
    %v216 = vunpack.c.l.b16 %v177
    %v217 = vunpack.c.l.b16 %v178
    %v218 = vunpack.c.l.b16 %v179
    %v219 = vunpack.c.l.b16 %v180
    %v220 = vpack.c.b16 %v205, %v204
    %v221 = vpack.c.b16 %v207, %v206
    %v222 = vpack.c.b16 %v209, %v208
    %v223 = vpack.c.b16 %v211, %v210
    %v224 = vpack.c.b16 %v213, %v212
    %v225 = vpack.c.b16 %v215, %v214
    %v226 = vpack.c.b16 %v217, %v216
    %v227 = vpack.c.b16 %v219, %v218
    %236 = vmatprep.subr.bf16.mxu0 0
    %237 = vmatpush1.bf16.msra.mxu0 %v220
    %238 = vmatprep.subr.bf16.mxu0 0
    %239 = vmatpush1.bf16.msra.mxu0 %v221
    %240 = vmatprep.subr.bf16.mxu0 0
    %241 = vmatpush1.bf16.msra.mxu0 %v222
    %242 = vmatprep.subr.bf16.mxu0 0
    %243 = vmatpush1.bf16.msra.mxu0 %v223
    %244 = vmatprep.subr.bf16.mxu0 0
    %245 = vmatpush1.bf16.msra.mxu0 %v224
    %246 = vmatprep.subr.bf16.mxu0 0
    %247 = vmatpush1.bf16.msra.mxu0 %v225
    %248 = vmatprep.subr.bf16.mxu0 0
    %249 = vmatpush1.bf16.msra.mxu0 %v226
    %250 = vmatprep.subr.bf16.mxu0 0
    %251 = vmatpush1.bf16.msra.mxu0 %v227
    %252 = vmatprep.subr.bf16.mxu0 0
    %253 = vmatpush1.bf16.msra.mxu0 0
    %254 = vmatprep.subr.bf16.mxu0 0
    %255 = vmatpush1.bf16.msra.mxu0 0
    %256 = vmatprep.subr.bf16.mxu0 0
    %257 = vmatpush1.bf16.msra.mxu0 0
    %258 = vmatprep.subr.bf16.mxu0 0
    %259 = vmatpush1.bf16.msra.mxu0 0
    %260 = vmatprep.subr.bf16.mxu0 0
    %261 = vmatpush1.bf16.msra.mxu0 0
    %262 = vmatprep.subr.bf16.mxu0 0
    %263 = vmatpush1.bf16.msra.mxu0 0
    %264 = vmatprep.subr.bf16.mxu0 0
    %265 = vmatpush1.bf16.msra.mxu0 0
    %266 = vmatprep.subr.bf16.mxu0 0
    %267 = vmatpush1.bf16.msra.mxu0 0
    %268 = vmatprep.mubr.bf16.mxu0 0
    %269 = vmatmul.mubr.bf16.gmra.mrb[0].mxu0 %v163
    %v270 = vpop.f32.mrb[0].mxu0
    %v271 = vadd.f32 %v186, %v270
    %v272 = vpop.f32.mrb[0].mxu0
    %v273 = vpop.f32.mrb[0].mxu0
    %v274 = vpop.f32.mrb[0].mxu0
    %275 = vdwg.mxu0
    %v276 = vmax.f32 %v271, 0.0
    %v277 = vpack.c.bf16 %v276, %v276
    %v278 = vld [vmem:[#allocation2] sm:$0xf]
    %v279 = vld [vmem:[#allocation2 + $0x4] sm:$0xf]
    %v280 = vld [vmem:[#allocation2 + $0x8] sm:$0xf]
    %v281 = vld [vmem:[#allocation2 + $0xc] sm:$0xf]
    %v282 = vld [vmem:[#allocation2 + $0x10] sm:$0xf]
    %v283 = vld [vmem:[#allocation2 + $0x14] sm:$0xf]
    %v284 = vld [vmem:[#allocation2 + $0x18] sm:$0xf]
    %v285 = vld [vmem:[#allocation2 + $0x1c] sm:$0xf]
    %v286 = vld [vmem:[#allocation2 + $0x20] sm:$0xf]
    %v287 = vld [vmem:[#allocation2 + $0x24] sm:$0xf]
    %v288 = vld [vmem:[#allocation2 + $0x28] sm:$0xf]
    %v289 = vld [vmem:[#allocation2 + $0x2c] sm:$0xf]
    %v290 = vld [vmem:[#allocation2 + $0x30] sm:$0xf]
    %v291 = vld [vmem:[#allocation2 + $0x34] sm:$0xf]
    %v292 = vld [vmem:[#allocation2 + $0x38] sm:$0xf]
    %v293 = vld [vmem:[#allocation2 + $0x3c] sm:$0xf]
    %v294 = vld [vmem:[%s6] sm:$0x1]
    %v296 = vlaneseq
    %v297 = vshrl.u32 %v296, 7
    %v298 = vsub.s32 0, %v297
    %v299 = vrot.slane %v294, %v298
    %v317 = vunpack.c.l.b16 %v278
    %v318 = vunpack.c.l.b16 %v279
    %v319 = vunpack.c.l.b16 %v280
    %v320 = vunpack.c.l.b16 %v281
    %v321 = vunpack.c.l.b16 %v282
    %v322 = vunpack.c.l.b16 %v283
    %v323 = vunpack.c.l.b16 %v284
    %v324 = vunpack.c.l.b16 %v285
    %v325 = vunpack.c.l.b16 %v286
    %v326 = vunpack.c.l.b16 %v287
    %v327 = vunpack.c.l.b16 %v288
    %v328 = vunpack.c.l.b16 %v289
    %v329 = vunpack.c.l.b16 %v290
    %v330 = vunpack.c.l.b16 %v291
    %v331 = vunpack.c.l.b16 %v292
    %v332 = vunpack.c.l.b16 %v293
    %v333 = vpack.c.b16 %v318, %v317
    %v334 = vpack.c.b16 %v320, %v319
    %v335 = vpack.c.b16 %v322, %v321
    %v336 = vpack.c.b16 %v324, %v323
    %v337 = vpack.c.b16 %v326, %v325
    %v338 = vpack.c.b16 %v328, %v327
    %v339 = vpack.c.b16 %v330, %v329
    %v340 = vpack.c.b16 %v332, %v331
    %349 = vmatprep.subr.bf16.mxu0 0
    %350 = vmatpush1.bf16.msra.mxu0 %v333
    %351 = vmatprep.subr.bf16.mxu0 0
    %352 = vmatpush1.bf16.msra.mxu0 %v334
    %353 = vmatprep.subr.bf16.mxu0 0
    %354 = vmatpush1.bf16.msra.mxu0 %v335
    %355 = vmatprep.subr.bf16.mxu0 0
    %356 = vmatpush1.bf16.msra.mxu0 %v336
    %357 = vmatprep.subr.bf16.mxu0 0
    %358 = vmatpush1.bf16.msra.mxu0 %v337
    %359 = vmatprep.subr.bf16.mxu0 0
    %360 = vmatpush1.bf16.msra.mxu0 %v338
    %361 = vmatprep.subr.bf16.mxu0 0
    %362 = vmatpush1.bf16.msra.mxu0 %v339
    %363 = vmatprep.subr.bf16.mxu0 0
    %364 = vmatpush1.bf16.msra.mxu0 %v340
    %365 = vmatprep.subr.bf16.mxu0 0
    %366 = vmatpush1.bf16.msra.mxu0 0
    %367 = vmatprep.subr.bf16.mxu0 0
    %368 = vmatpush1.bf16.msra.mxu0 0
    %369 = vmatprep.subr.bf16.mxu0 0
    %370 = vmatpush1.bf16.msra.mxu0 0
    %371 = vmatprep.subr.bf16.mxu0 0
    %372 = vmatpush1.bf16.msra.mxu0 0
    %373 = vmatprep.subr.bf16.mxu0 0
    %374 = vmatpush1.bf16.msra.mxu0 0
    %375 = vmatprep.subr.bf16.mxu0 0
    %376 = vmatpush1.bf16.msra.mxu0 0
    %377 = vmatprep.subr.bf16.mxu0 0
    %378 = vmatpush1.bf16.msra.mxu0 0
    %379 = vmatprep.subr.bf16.mxu0 0
    %380 = vmatpush1.bf16.msra.mxu0 0
    %381 = vmatprep.mubr.bf16.mxu0 0
    %382 = vmatmul.mubr.bf16.gmra.mrb[0].mxu0 %v164
    %v383 = vpop.f32.mrb[0].mxu0
    %v384 = vadd.f32 %v299, %v383
    %v385 = vpop.f32.mrb[0].mxu0
    %v386 = vpop.f32.mrb[0].mxu0
    %v387 = vpop.f32.mrb[0].mxu0
    %388 = vdwg.mxu0
    %v389 = vmax.f32 %v384, 0.0
    %v390 = vpack.c.bf16 %v389, %v389
    %v391 = vld [vmem:[%s7] sm:$0xf]
    %v392 = vld [vmem:[%s7 + $0x4] sm:$0xf]
    %v393 = vld [vmem:[%s7 + $0x8] sm:$0xf]
    %v394 = vld [vmem:[%s7 + $0xc] sm:$0xf]
    %v395 = vld [vmem:[%s7 + $0x10] sm:$0xf]
    %v396 = vld [vmem:[%s7 + $0x14] sm:$0xf]
    %v397 = vld [vmem:[%s7 + $0x18] sm:$0xf]
    %v398 = vld [vmem:[%s7 + $0x1c] sm:$0xf]
    %v399 = vld [vmem:[%s7 + $0x20] sm:$0xf]
    %v400 = vld [vmem:[%s7 + $0x24] sm:$0xf]
    %v401 = vld [vmem:[%s7 + $0x28] sm:$0xf]
    %v402 = vld [vmem:[%s7 + $0x2c] sm:$0xf]
    %v403 = vld [vmem:[%s7 + $0x30] sm:$0xf]
    %v404 = vld [vmem:[%s7 + $0x34] sm:$0xf]
    %v405 = vld [vmem:[%s7 + $0x38] sm:$0xf]
    %v406 = vld [vmem:[%s7 + $0x3c] sm:$0xf]
    %v407 = vld [vmem:[%s9] sm:$0x1]
    %v409 = vlaneseq
    %v410 = vshrl.u32 %v409, 7
    %v411 = vsub.s32 0, %v410
    %v412 = vrot.slane %v407, %v411
    %v430 = vunpack.c.l.b16 %v391
    %v431 = vunpack.c.l.b16 %v392
    %v432 = vunpack.c.l.b16 %v393
    %v433 = vunpack.c.l.b16 %v394
    %v434 = vunpack.c.l.b16 %v395
    %v435 = vunpack.c.l.b16 %v396
    %v436 = vunpack.c.l.b16 %v397
    %v437 = vunpack.c.l.b16 %v398
    %v438 = vunpack.c.l.b16 %v399
    %v439 = vunpack.c.l.b16 %v400
    %v440 = vunpack.c.l.b16 %v401
    %v441 = vunpack.c.l.b16 %v402
    %v442 = vunpack.c.l.b16 %v403
    %v443 = vunpack.c.l.b16 %v404
    %v444 = vunpack.c.l.b16 %v405
    %v445 = vunpack.c.l.b16 %v406
    %v446 = vpack.c.b16 %v431, %v430
    %v447 = vpack.c.b16 %v433, %v432
    %v448 = vpack.c.b16 %v435, %v434
    %v449 = vpack.c.b16 %v437, %v436
    %v450 = vpack.c.b16 %v439, %v438
    %v451 = vpack.c.b16 %v441, %v440
    %v452 = vpack.c.b16 %v443, %v442
    %v453 = vpack.c.b16 %v445, %v444
    %462 = vmatprep.subr.bf16.mxu0 0
    %463 = vmatpush1.bf16.msra.mxu0 %v446
    %464 = vmatprep.subr.bf16.mxu0 0
    %465 = vmatpush1.bf16.msra.mxu0 %v447
    %466 = vmatprep.subr.bf16.mxu0 0
    %467 = vmatpush1.bf16.msra.mxu0 %v448
    %468 = vmatprep.subr.bf16.mxu0 0
    %469 = vmatpush1.bf16.msra.mxu0 %v449
    %470 = vmatprep.subr.bf16.mxu0 0
    %471 = vmatpush1.bf16.msra.mxu0 %v450
    %472 = vmatprep.subr.bf16.mxu0 0
    %473 = vmatpush1.bf16.msra.mxu0 %v451
    %474 = vmatprep.subr.bf16.mxu0 0
    %475 = vmatpush1.bf16.msra.mxu0 %v452
    %476 = vmatprep.subr.bf16.mxu0 0
    %477 = vmatpush1.bf16.msra.mxu0 %v453
    %478 = vmatprep.subr.bf16.mxu0 0
    %479 = vmatpush1.bf16.msra.mxu0 0
    %480 = vmatprep.subr.bf16.mxu0 0
    %481 = vmatpush1.bf16.msra.mxu0 0
    %482 = vmatprep.subr.bf16.mxu0 0
    %483 = vmatpush1.bf16.msra.mxu0 0
    %484 = vmatprep.subr.bf16.mxu0 0
    %485 = vmatpush1.bf16.msra.mxu0 0
    %486 = vmatprep.subr.bf16.mxu0 0
    %487 = vmatpush1.bf16.msra.mxu0 0
    %488 = vmatprep.subr.bf16.mxu0 0
    %489 = vmatpush1.bf16.msra.mxu0 0
    %490 = vmatprep.subr.bf16.mxu0 0
    %491 = vmatpush1.bf16.msra.mxu0 0
    %492 = vmatprep.subr.bf16.mxu0 0
    %493 = vmatpush1.bf16.msra.mxu0 0
    %494 = vmatprep.mubr.bf16.mxu0 0
    %495 = vmatmul.mubr.bf16.gmra.mrb[0].mxu0 %v277
    %v496 = vpop.f32.mrb[0].mxu0
    %v497 = vadd.f32 %v412, %v496
    %v498 = vpop.f32.mrb[0].mxu0
    %v499 = vpop.f32.mrb[0].mxu0
    %v500 = vpop.f32.mrb[0].mxu0
    %501 = vdwg.mxu0
    %v502 = vmax.f32 %v497, 0.0
    %v503 = vld [vmem:[%s8] sm:$0xf]
    %v504 = vld [vmem:[%s8 + $0x4] sm:$0xf]
    %v505 = vld [vmem:[%s8 + $0x8] sm:$0xf]
    %v506 = vld [vmem:[%s8 + $0xc] sm:$0xf]
    %v507 = vld [vmem:[%s8 + $0x10] sm:$0xf]
    %v508 = vld [vmem:[%s8 + $0x14] sm:$0xf]
    %v509 = vld [vmem:[%s8 + $0x18] sm:$0xf]
    %v510 = vld [vmem:[%s8 + $0x1c] sm:$0xf]
    %v511 = vld [vmem:[%s8 + $0x20] sm:$0xf]
    %v512 = vld [vmem:[%s8 + $0x24] sm:$0xf]
    %v513 = vld [vmem:[%s8 + $0x28] sm:$0xf]
    %v514 = vld [vmem:[%s8 + $0x2c] sm:$0xf]
    %v515 = vld [vmem:[%s8 + $0x30] sm:$0xf]
    %v516 = vld [vmem:[%s8 + $0x34] sm:$0xf]
    %v517 = vld [vmem:[%s8 + $0x38] sm:$0xf]
    %v518 = vld [vmem:[%s8 + $0x3c] sm:$0xf]
    %v519 = vld [vmem:[%s10] sm:$0x1]
    %v521 = vlaneseq
    %v522 = vshrl.u32 %v521, 7
    %v523 = vsub.s32 0, %v522
    %v524 = vrot.slane %v519, %v523
    %v542 = vunpack.c.l.b16 %v503
    %v543 = vunpack.c.l.b16 %v504
    %v544 = vunpack.c.l.b16 %v505
    %v545 = vunpack.c.l.b16 %v506
    %v546 = vunpack.c.l.b16 %v507
    %v547 = vunpack.c.l.b16 %v508
    %v548 = vunpack.c.l.b16 %v509
    %v549 = vunpack.c.l.b16 %v510
    %v550 = vunpack.c.l.b16 %v511
    %v551 = vunpack.c.l.b16 %v512
    %v552 = vunpack.c.l.b16 %v513
    %v553 = vunpack.c.l.b16 %v514
    %v554 = vunpack.c.l.b16 %v515
    %v555 = vunpack.c.l.b16 %v516
    %v556 = vunpack.c.l.b16 %v517
    %v557 = vunpack.c.l.b16 %v518
    %v558 = vpack.c.b16 %v543, %v542
    %v559 = vpack.c.b16 %v545, %v544
    %v560 = vpack.c.b16 %v547, %v546
    %v561 = vpack.c.b16 %v549, %v548
    %v562 = vpack.c.b16 %v551, %v550
    %v563 = vpack.c.b16 %v553, %v552
    %v564 = vpack.c.b16 %v555, %v554
    %v565 = vpack.c.b16 %v557, %v556
    %574 = vmatprep.subr.bf16.mxu0 0
    %575 = vmatpush1.bf16.msra.mxu0 %v558
    %576 = vmatprep.subr.bf16.mxu0 0
    %577 = vmatpush1.bf16.msra.mxu0 %v559
    %578 = vmatprep.subr.bf16.mxu0 0
    %579 = vmatpush1.bf16.msra.mxu0 %v560
    %580 = vmatprep.subr.bf16.mxu0 0
    %581 = vmatpush1.bf16.msra.mxu0 %v561
    %582 = vmatprep.subr.bf16.mxu0 0
    %583 = vmatpush1.bf16.msra.mxu0 %v562
    %584 = vmatprep.subr.bf16.mxu0 0
    %585 = vmatpush1.bf16.msra.mxu0 %v563
    %586 = vmatprep.subr.bf16.mxu0 0
    %587 = vmatpush1.bf16.msra.mxu0 %v564
    %588 = vmatprep.subr.bf16.mxu0 0
    %589 = vmatpush1.bf16.msra.mxu0 %v565
    %590 = vmatprep.subr.bf16.mxu0 0
    %591 = vmatpush1.bf16.msra.mxu0 0
    %592 = vmatprep.subr.bf16.mxu0 0
    %593 = vmatpush1.bf16.msra.mxu0 0
    %594 = vmatprep.subr.bf16.mxu0 0
    %595 = vmatpush1.bf16.msra.mxu0 0
    %596 = vmatprep.subr.bf16.mxu0 0
    %597 = vmatpush1.bf16.msra.mxu0 0
    %598 = vmatprep.subr.bf16.mxu0 0
    %599 = vmatpush1.bf16.msra.mxu0 0
    %600 = vmatprep.subr.bf16.mxu0 0
    %601 = vmatpush1.bf16.msra.mxu0 0
    %602 = vmatprep.subr.bf16.mxu0 0
    %603 = vmatpush1.bf16.msra.mxu0 0
    %604 = vmatprep.subr.bf16.mxu0 0
    %605 = vmatpush1.bf16.msra.mxu0 0
    %606 = vmatprep.mubr.bf16.mxu0 0
    %607 = vmatmul.mubr.bf16.gmra.mrb[0].mxu0 %v390
    %v608 = vpop.f32.mrb[0].mxu0
    %v609 = vadd.f32 %v524, %v608
    %v610 = vpop.f32.mrb[0].mxu0
    %v611 = vpop.f32.mrb[0].mxu0
    %v612 = vpop.f32.mrb[0].mxu0
    %613 = vdwg.mxu0
    %v614 = vmax.f32 %v609, 0.0
    %v615 = vadd.f32 %v502, %v614
    %vm616 = vcmask 130048
    %617 = vst.msk [vmem:[#allocation5] sm:$0xff] %vm616, %v615
    // Predicated region
    $region50: #{tpu_custom_call.1} parent=1 // pred_check
      _
    $region51: #{tpu_custom_call.1} parent=1 // pred_check_branch
      %619 = sbr.rel (0) target = $region53
    $region52: #{tpu_custom_call.1} parent=1 // pred_region
      %s621 = ssub.s32 128, 128
      %622 = vsyncadd [#allocation4], %s621
      %s624 = sshll.u32 [#allocation5], 4
      %s625 = int_to_ptr.vmem [resolvable:$true] %s624
      %627 = dma.vmem_to_hbm [thread:$0]  %s625, 128, %s11, [#allocation4]
    $region53: #{tpu_custom_call.1} parent=1 // pred_fallthru
      _
    // Predicated region
    $region54: #{tpu_custom_call.1} parent=1 // pred_check
      _
    $region55: #{tpu_custom_call.1} parent=1 // pred_check_branch
      %629 = sbr.rel (0) target = $region57
    $region56: #{tpu_custom_call.1} parent=1 // pred_region
      %630 = dma.done [#allocation4], 128
    $region57: #{tpu_custom_call.1} parent=1 // pred_fallthru
      _
    %631 = vsyncpa [#allocation3], 1
    %632 = vsyncpa [#allocation4], 1

</llo_original>
